<compile_context>
chip_gen: v5e
topology: v5e:2x2
jax: 0.10.0
libtpu: 0.0.40
codegen_flags: <defaults>
</compile_context>

<pallas_src>
import functools
import math

import jax
import jax.numpy as jnp
from jax.experimental import pallas as pl
from jax.experimental.pallas import tpu as pltpu


# ----------------------------------------------------------------------------
# helpers
# ----------------------------------------------------------------------------
def _pick_tile(dim, target, align):
    """Largest tile <= target that is `align`-aligned and divides `dim`
    (or the full dim if dim <= target / no aligned divisor exists)."""
    if dim <= target:
        return dim
    t = (target // align) * align
    while t >= align:
        if dim % t == 0:
            return t
        t -= align
    return dim


# ----------------------------------------------------------------------------
# Linear (+ optional ReLU, + optional fused residual add)
# ----------------------------------------------------------------------------
def _linear_kernel(x_ref, w_ref, b_ref, *rest, relu, has_res):
    if has_res:
        res_ref, o_ref, acc_ref = rest
    else:
        res_ref = None
        o_ref, acc_ref = rest

    k = pl.program_id(2)

    @pl.when(k == 0)
    def _():
        acc_ref[...] = jnp.zeros_like(acc_ref)

    # bf16 MXU path, f32 accumulation.
    acc_ref[...] += jnp.dot(
        x_ref[...].astype(jnp.bfloat16),
        w_ref[...].astype(jnp.bfloat16),
        preferred_element_type=jnp.float32,
    )

    @pl.when(k == pl.num_programs(2) - 1)
    def _():
        y = acc_ref[...] + b_ref[...].astype(jnp.float32)
        if relu:
            y = jnp.maximum(y, 0.0)
        if has_res:
            y = y + res_ref[...].astype(jnp.float32)
        o_ref[...] = y.astype(o_ref.dtype)


def linear(x2d, w, b, residual=None, relu=False, out_dtype=jnp.float32):
    """x2d: (M, K), w: (K, N), b: (N,) -> (M, N).  nn.Linear (+ReLU, +residual)."""
    M, K = x2d.shape
    Kw, N = w.shape
    assert K == Kw
    tm = _pick_tile(M, 256, 8)
    tn = _pick_tile(N, 256, 128)
    tk = _pick_tile(K, 512, 128)
    grid = (M // tm, N // tn, K // tk)

    in_specs = [
        pl.BlockSpec((tm, tk), lambda i, j, k: (i, k)),
        pl.BlockSpec((tk, tn), lambda i, j, k: (k, j)),
        pl.BlockSpec((1, tn), lambda i, j, k: (0, j)),
    ]
    args = [x2d, w, b.reshape(1, N)]
    has_res = residual is not None
    if has_res:
        in_specs.append(pl.BlockSpec((tm, tn), lambda i, j, k: (i, j)))
        args.append(residual)

    bytes_accessed = (
        x2d.size * x2d.dtype.itemsize
        + w.size * w.dtype.itemsize
        + b.size * b.dtype.itemsize
        + M * N * jnp.dtype(out_dtype).itemsize
        + (M * N * 4 if has_res else 0)
    )

    return pl.pallas_call(
        functools.partial(_linear_kernel, relu=relu, has_res=has_res),
        out_shape=jax.ShapeDtypeStruct((M, N), out_dtype),
        grid=grid,
        in_specs=in_specs,
        out_specs=pl.BlockSpec((tm, tn), lambda i, j, k: (i, j)),
        scratch_shapes=[pltpu.VMEM((tm, tn), jnp.float32)],
        compiler_params=pltpu.CompilerParams(
            dimension_semantics=("parallel", "parallel", "arbitrary"),
            vmem_limit_bytes=32 * 1024 * 1024,
        ),
        cost_estimate=pl.CostEstimate(
            flops=2 * M * N * K,
            transcendentals=0,
            bytes_accessed=int(bytes_accessed),
        ),
    )(*args)


# ----------------------------------------------------------------------------
# Custom Norm: alpha * (x - mean) / (unbiased_std + eps) + bias
# ----------------------------------------------------------------------------
def _norm_kernel(x_ref, a_ref, b_ref, o_ref, *, eps, d):
    x = x_ref[...]
    mean = jnp.mean(x, axis=-1, keepdims=True)
    # torch.std default is the *unbiased* estimator (divide by d-1)
    var = jnp.sum((x - mean) ** 2, axis=-1, keepdims=True) / (d - 1)
    std = jnp.sqrt(var)
    o_ref[...] = a_ref[...] * (x - mean) / (std + eps) + b_ref[...]


def norm(x3d, alpha, bias, eps=1e-6):
    B, L, D = x3d.shape
    M = B * L
    x2d = x3d.reshape(M, D)
    tr = _pick_tile(M, 512, 8)
    out = pl.pallas_call(
        functools.partial(_norm_kernel, eps=eps, d=D),
        out_shape=jax.ShapeDtypeStruct((M, D), jnp.float32),
        grid=(M // tr,),
        in_specs=[
            pl.BlockSpec((tr, D), lambda i: (i, 0)),
            pl.BlockSpec((1, D), lambda i: (0, 0)),
            pl.BlockSpec((1, D), lambda i: (0, 0)),
        ],
        out_specs=pl.BlockSpec((tr, D), lambda i: (i, 0)),
        compiler_params=pltpu.CompilerParams(dimension_semantics=("parallel",)),
    )(x2d, alpha.reshape(1, D), bias.reshape(1, D))
    return out.reshape(B, L, D)


# ----------------------------------------------------------------------------
# Scaled-dot-product attention (all heads per grid step, one batch per step)
# ----------------------------------------------------------------------------
def _mha_core(q, kv, mask_add, o_ref, *, heads, scale):
    """q: (Lq, D), kv: (Lk, 2D), mask_add: (Lm, Lk) additive f32 (broadcasts)."""
    Lq, D = q.shape
    dk = D // heads
    # Scale Q once (Lq x D) instead of scaling H score matrices (Lq x Lk each).
    qb = (q.astype(jnp.float32) * scale).astype(jnp.bfloat16)
    kvb = kv.astype(jnp.bfloat16)
    outs = []
    for h in range(heads):
        lo, hi = h * dk, (h + 1) * dk
        qh = qb[:, lo:hi]                 # (Lq, dk)
        kh = kvb[:, lo:hi]                # (Lk, dk)
        vh = kvb[:, D + lo:D + hi]        # (Lk, dk)
        # q @ k^T without an in-kernel transpose (contract last dims of both).
        s = jax.lax.dot_general(
            qh, kh, (((1,), (1,)), ((), ())),
            preferred_element_type=jnp.float32)
        s = s + mask_add                  # additive mask, broadcasts (Lm,Lk)->(Lq,Lk)
        s = s - jnp.max(s, axis=-1, keepdims=True)
        p = jnp.exp(s)
        inv = pl.reciprocal(jnp.sum(p, axis=-1, keepdims=True), approx=True)
        oh = jnp.dot(p.astype(jnp.bfloat16), vh,
                     preferred_element_type=jnp.float32)
        outs.append(oh * inv)
    # Single lane-dense (Lq, D) store instead of H narrow column stores.
    o_ref[0] = jnp.concatenate(outs, axis=-1).astype(o_ref.dtype)


def _self_attn_kernel(qkv_ref, mask_ref, o_ref, *, heads, scale, d_model):
    qkv = qkv_ref[0]                      # (Lq, 3D)
    _mha_core(qkv[:, :d_model], qkv[:, d_model:], mask_ref[0], o_ref,
              heads=heads, scale=scale)


def _cross_attn_kernel(q_ref, kv_ref, mask_ref, o_ref, *, heads, scale):
    _mha_core(q_ref[0], kv_ref[0], mask_ref[0], o_ref, heads=heads, scale=scale)


def _additive_mask(mask):
    m = jnp.asarray(mask, jnp.float32)
    if m.ndim == 2:
        m = m[None]
    return (m - 1.0) * 1e9                # 0 where visible, -1e9 where masked


def _attn_cost(B, Lq, Lk, D):
    flops = 2 * B * (2 * Lq * Lk * D)     # scores + PV, all heads combined
    bytes_accessed = 4 * B * (Lq * 3 * D + Lq * Lk + Lq * D)
    return pl.CostEstimate(flops=int(flops), transcendentals=int(B * Lq * Lk),
                           bytes_accessed=int(bytes_accessed))


def self_attention(p, x_in, mask, heads, residual):
    B, Lq, D = x_in.shape
    # Fused Q|K|V projection: one read of the activation slab.
    qkv = linear(x_in.reshape(B * Lq, D), p["wqkv"], p["bqkv"],
                 out_dtype=jnp.bfloat16).reshape(B, Lq, 3 * D)
    mask_add = _additive_mask(mask)
    mB, Lm, Lk = mask_add.shape
    mask_idx = (lambda b: (b, 0, 0)) if mB == B else (lambda b: (0, 0, 0))
    scale = 1.0 / math.sqrt(D // heads)

    attn = pl.pallas_call(
        functools.partial(_self_attn_kernel, heads=heads, scale=scale, d_model=D),
        out_shape=jax.ShapeDtypeStruct((B, Lq, D), jnp.bfloat16),
        grid=(B,),
        in_specs=[
            pl.BlockSpec((1, Lq, 3 * D), lambda b: (b, 0, 0)),
            pl.BlockSpec((1, Lm, Lk), mask_idx),
        ],
        out_specs=pl.BlockSpec((1, Lq, D), lambda b: (b, 0, 0)),
        compiler_params=pltpu.CompilerParams(
            dimension_semantics=("parallel",),
            vmem_limit_bytes=32 * 1024 * 1024,
        ),
        cost_estimate=_attn_cost(B, Lq, Lq, D),
    )(qkv, mask_add)

    # Output projection with the residual add fused in-kernel.
    return linear(attn.reshape(B * Lq, D), p["wo"], p["bo"],
                  residual=residual.reshape(B * Lq, D)).reshape(B, Lq, D)


def cross_attention(p, x_in, enc, mask, heads, residual):
    B, Lq, D = x_in.shape
    Lk = enc.shape[1]
    q = linear(x_in.reshape(B * Lq, D), p["wq"], p["bq"],
               out_dtype=jnp.bfloat16).reshape(B, Lq, D)
    kv = linear(enc.reshape(B * Lk, D), p["wkv"], p["bkv"],
                out_dtype=jnp.bfloat16).reshape(B, Lk, 2 * D)
    mask_add = _additive_mask(mask)
    mB, Lm, Lk_m = mask_add.shape
    mask_idx = (lambda b: (b, 0, 0)) if mB == B else (lambda b: (0, 0, 0))
    scale = 1.0 / math.sqrt(D // heads)

    attn = pl.pallas_call(
        functools.partial(_cross_attn_kernel, heads=heads, scale=scale),
        out_shape=jax.ShapeDtypeStruct((B, Lq, D), jnp.bfloat16),
        grid=(B,),
        in_specs=[
            pl.BlockSpec((1, Lq, D), lambda b: (b, 0, 0)),
            pl.BlockSpec((1, Lk, 2 * D), lambda b: (b, 0, 0)),
            pl.BlockSpec((1, Lm, Lk_m), mask_idx),
        ],
        out_specs=pl.BlockSpec((1, Lq, D), lambda b: (b, 0, 0)),
        compiler_params=pltpu.CompilerParams(
            dimension_semantics=("parallel",),
            vmem_limit_bytes=32 * 1024 * 1024,
        ),
        cost_estimate=_attn_cost(B, Lq, Lk, D),
    )(q, kv, mask_add)

    return linear(attn.reshape(B * Lq, D), p["wo"], p["bo"],
                  residual=residual.reshape(B * Lq, D)).reshape(B, Lq, D)


# ----------------------------------------------------------------------------
# Decoder forward (mirrors the PyTorch module; dropout = identity at eval)
# ----------------------------------------------------------------------------
def decoder_layer(p, x, e_outputs, src_mask, trg_mask, heads):
    B, L, D = x.shape
    x2 = norm(x, p["n1_a"], p["n1_b"])
    x = self_attention(p["attn1"], x2, trg_mask, heads, residual=x)
    x2 = norm(x, p["n2_a"], p["n2_b"])
    x = cross_attention(p["attn2"], x2, e_outputs, src_mask, heads, residual=x)
    x2 = norm(x, p["n3_a"], p["n3_b"])
    h = linear(x2.reshape(B * L, D), p["ff_w1"], p["ff_b1"],
               relu=True, out_dtype=jnp.bfloat16)
    x = linear(h, p["ff_w2"], p["ff_b2"],
               residual=x.reshape(B * L, D)).reshape(B, L, D)
    return x


def decoder_forward(params, trg, e_outputs, src_mask, trg_mask, heads):
    d_model = params["embed"].shape[1]
    # Embedder: embedding lookup (glue, gather in plain JAX)
    x = jnp.take(params["embed"], trg, axis=0)            # (B, L, D)
    # PositionalEncoder: x * sqrt(d_model) + pe  (dropout identity in eval)
    L = trg.shape[1]
    x = x * math.sqrt(d_model) + params["pe"][:L]
    for lp in params["layers"]:
        x = decoder_layer(lp, x, e_outputs, src_mask, trg_mask, heads)
    return norm(x, params["norm_a"], params["norm_b"])


# ----------------------------------------------------------------------------
# Deterministic parameter init (weights stored bf16 for the MXU path)
# ----------------------------------------------------------------------------
def make_pe(max_len, d_model):
    pos = jnp.arange(max_len, dtype=jnp.float32)[:, None]
    i = jnp.arange(0, d_model, 2, dtype=jnp.float32)
    sin = jnp.sin(pos / jnp.power(10000.0, (2.0 * i) / d_model))
    cos = jnp.cos(pos / jnp.power(10000.0, (2.0 * (i + 1.0)) / d_model))
    return jnp.stack([sin, cos], axis=-1).reshape(max_len, d_model)


def _dense(key, fan_in, fan_out):
    w = jax.random.normal(key, (fan_in, fan_out), jnp.float32) * 0.02
    return w.astype(jnp.bfloat16)


def init_params(key, vocab_size, d_model, N, heads, d_ff, max_len=200):
    keys = iter(jax.random.split(key, 4 + N * 10))
    params = {
        "embed": jax.random.normal(next(keys), (vocab_size, d_model), jnp.float32) * 0.02,
        "pe": make_pe(max_len, d_model),
        "norm_a": jnp.ones((d_model,), jnp.float32),
        "norm_b": jnp.zeros((d_model,), jnp.float32),
        "layers": [],
    }
    zeros_d = jnp.zeros((d_model,), jnp.float32)
    for _ in range(N):
        layer = {
            "n1_a": jnp.ones((d_model,), jnp.float32), "n1_b": jnp.zeros((d_model,), jnp.float32),
            "n2_a": jnp.ones((d_model,), jnp.float32), "n2_b": jnp.zeros((d_model,), jnp.float32),
            "n3_a": jnp.ones((d_model,), jnp.float32), "n3_b": jnp.zeros((d_model,), jnp.float32),
            "attn1": {  # self-attention: fused Q|K|V
                "wqkv": _dense(next(keys), d_model, 3 * d_model),
                "bqkv": jnp.zeros((3 * d_model,), jnp.float32),
                "wo": _dense(next(keys), d_model, d_model), "bo": zeros_d,
            },
            "attn2": {  # cross-attention: Q separate, fused K|V
                "wq": _dense(next(keys), d_model, d_model), "bq": zeros_d,
                "wkv": _dense(next(keys), d_model, 2 * d_model),
                "bkv": jnp.zeros((2 * d_model,), jnp.float32),
                "wo": _dense(next(keys), d_model, d_model), "bo": zeros_d,
            },
            "ff_w1": _dense(next(keys), d_model, d_ff), "ff_b1": jnp.zeros((d_ff,), jnp.float32),
            "ff_w2": _dense(next(keys), d_ff, d_model), "ff_b2": zeros_d,
        }
        params["layers"].append(layer)
    return params


# ----------------------------------------------------------------------------
if __name__ == "__main__":
    vocab_size, d_model, N, heads, dropout = 50, 32, 2, 4, 0.1
    d_ff = 64  # (PyTorch FeedForward default is 2048; small value for the demo)
    B, Lt, Ls = 2, 8, 8

    key = jax.random.PRNGKey(0)
    k_par, k_trg, k_enc = jax.random.split(key, 3)

    params = init_params(k_par, vocab_size, d_model, N, heads, d_ff)

    trg = jax.random.randint(k_trg, (B, Lt), 0, vocab_size)              # (2, 8) int tokens
    e_outputs = jax.random.normal(k_enc, (B, Ls, d_model), jnp.float32)  # encoder output
    src_mask = jnp.ones((B, 1, Ls), jnp.float32)                         # all-visible source
    trg_mask = jnp.broadcast_to(
        jnp.tril(jnp.ones((Lt, Lt), jnp.float32)), (B, Lt, Lt))          # no-peek mask

    out = decoder_forward(params, trg, e_outputs, src_mask, trg_mask, heads)
    out = jax.block_until_ready(out)
    assert out.shape == (B, Lt, d_model)
    assert bool(jnp.all(jnp.isfinite(out)))
    print("KERNEL_OK")
</pallas_src>

<mosaic_0001>
module attributes {stable_mosaic.version = 11 : i64} {
  func.func @_norm_kernel(%arg0: i32, %arg1: memref<16x32xf32, #tpu.memory_space<vmem>>, %arg2: memref<1x32xf32, #tpu.memory_space<vmem>>, %arg3: memref<1x32xf32, #tpu.memory_space<vmem>>, %arg4: memref<16x32xf32, #tpu.memory_space<vmem>>) attributes {dimension_semantics = [#tpu.dimension_semantics<parallel>], iteration_bounds = array<i64: 1>, scalar_prefetch = 0 : i64, scratch_operands = 0 : i64, tpu.core_type = #tpu.core_type<tc>, window_params = [{transform_indices = @transform_0, window_bounds = array<i64: 16, 32>}, {pipeline_mode = #tpu.pipeline_mode<synchronous>, transform_indices = @transform_1, window_bounds = array<i64: 1, 32>}, {pipeline_mode = #tpu.pipeline_mode<synchronous>, transform_indices = @transform_2, window_bounds = array<i64: 1, 32>}, {transform_indices = @transform_3, window_bounds = array<i64: 16, 32>}]} {
    %c0 = arith.constant 0 : index
    %c0_0 = arith.constant 0 : index
    %0 = vector.load %arg1[%c0, %c0_0] : memref<16x32xf32, #tpu.memory_space<vmem>>, vector<16x32xf32>
    %cst = arith.constant dense<0.000000e+00> : vector<16xf32>
    %1 = vector.multi_reduction <add>, %0, %cst [1] : vector<16x32xf32> to vector<16xf32>
    %2 = vector.shape_cast %1 : vector<16xf32> to vector<16x1xf32>
    %cst_1 = arith.constant 3.200000e+01 : f32
    %3 = vector.broadcast %cst_1 : f32 to vector<16x1xf32>
    %4 = arith.divf %2, %3 : vector<16x1xf32>
    %5 = vector.broadcast %4 : vector<16x1xf32> to vector<16x32xf32>
    %6 = arith.subf %0, %5 : vector<16x32xf32>
    %7 = arith.mulf %6, %6 : vector<16x32xf32>
    %cst_2 = arith.constant dense<0.000000e+00> : vector<16xf32>
    %8 = vector.multi_reduction <add>, %7, %cst_2 [1] : vector<16x32xf32> to vector<16xf32>
    %9 = vector.shape_cast %8 : vector<16xf32> to vector<16x1xf32>
    %cst_3 = arith.constant 3.100000e+01 : f32
    %10 = vector.broadcast %cst_3 : f32 to vector<16x1xf32>
    %11 = arith.divf %9, %10 : vector<16x1xf32>
    %12 = math.sqrt %11 : vector<16x1xf32>
    %c0_4 = arith.constant 0 : index
    %c0_5 = arith.constant 0 : index
    %13 = vector.load %arg2[%c0_4, %c0_5] : memref<1x32xf32, #tpu.memory_space<vmem>>, vector<1x32xf32>
    %14 = vector.broadcast %4 : vector<16x1xf32> to vector<16x32xf32>
    %15 = arith.subf %0, %14 : vector<16x32xf32>
    %16 = vector.broadcast %13 : vector<1x32xf32> to vector<16x32xf32>
    %17 = arith.mulf %16, %15 : vector<16x32xf32>
    %cst_6 = arith.constant 9.99999997E-7 : f32
    %18 = vector.broadcast %cst_6 : f32 to vector<16x1xf32>
    %19 = arith.addf %12, %18 : vector<16x1xf32>
    %20 = vector.broadcast %19 : vector<16x1xf32> to vector<16x32xf32>
    %21 = arith.divf %17, %20 : vector<16x32xf32>
    %c0_7 = arith.constant 0 : index
    %c0_8 = arith.constant 0 : index
    %22 = vector.load %arg3[%c0_7, %c0_8] : memref<1x32xf32, #tpu.memory_space<vmem>>, vector<1x32xf32>
    %23 = vector.broadcast %22 : vector<1x32xf32> to vector<16x32xf32>
    %24 = arith.addf %21, %23 : vector<16x32xf32>
    %c0_9 = arith.constant 0 : index
    %c0_10 = arith.constant 0 : index
    %25 = vector.load %arg4[%c0_9, %c0_10] : memref<16x32xf32, #tpu.memory_space<vmem>>, vector<16x32xf32>
    tpu.vector_store %arg4[%c0_9, %c0_10], %24 {strides = array<i32>} : memref<16x32xf32, #tpu.memory_space<vmem>>, vector<16x32xf32>,
    return
  }
  func.func @transform_0(%arg0: i32) -> (i32, i32) {
    %c0_i32 = arith.constant 0 : i32
    %c0_i32_0 = arith.constant 0 : i32
    return %arg0, %c0_i32 : i32, i32
  }
  func.func @transform_1(%arg0: i32) -> (i32, i32) {
    %c0_i32 = arith.constant 0 : i32
    %c0_i32_0 = arith.constant 0 : i32
    %c0_i32_1 = arith.constant 0 : i32
    return %c0_i32, %c0_i32_0 : i32, i32
  }
  func.func @transform_2(%arg0: i32) -> (i32, i32) {
    %c0_i32 = arith.constant 0 : i32
    %c0_i32_0 = arith.constant 0 : i32
    %c0_i32_1 = arith.constant 0 : i32
    return %c0_i32, %c0_i32_0 : i32, i32
  }
  func.func @transform_3(%arg0: i32) -> (i32, i32) {
    %c0_i32 = arith.constant 0 : i32
    %c0_i32_0 = arith.constant 0 : i32
    return %arg0, %c0_i32 : i32, i32
  }
}

</mosaic_0001>

<llo_original>
// kernel: tpu_custom_call.1
$region0: #{tpu_custom_call.1}
  #allocation0 [shape = 'u32[]', space=smem, size = 0x4, offset = 0x4, fixed_abs, tag = 'smem constant byte address 0x4 - core index']
  #allocation1 [shape = 'u32[72,128]{1,0:T(1,128)}', space=vmem, size = 0x9000, scoped, tag = 'internal scratch']
  %s0 = inlined_call_operand.hbm [shape: f32[16,32], index: 0, kind: input, shape index: {}]
  %s1 = inlined_call_operand.hbm [shape: f32[1,32], index: 1, kind: input, shape index: {}]
  %s2 = inlined_call_operand.vmem [shape: f32[1,32], index: 2, kind: input, shape index: {}]
  %s3 = inlined_call_operand.hbm [shape: f32[16,32], index: 3, kind: output, shape index: {}]
  %s4 = sld [smem:[#allocation0]]
  $region30: #{tpu_custom_call.1} parent=0
    _
  %s6 = ssub.s32 1, %s4
  %s7 = scalar_select 0, %s6, %s4
  $region1: #{tpu_custom_call.1} parent=0
    #allocation2 [shape = 'u8[8192]{0}', space=vmem, size = 0x2000, scoped, tag = 'input window, operand 0, single buffered']
    #allocation3 [shape = 's32[1]{0}', space=sflag, size = 0x4, scoped, tag = 'scoped memory for tpu_custom_call.1']
    #allocation4 [shape = 's32[1]{0}', space=sflag, size = 0x4, scoped, tag = 'scoped memory for tpu_custom_call.1']
    #allocation5 [shape = 'u8[512]{0}', space=vmem, size = 0x400, scoped, tag = 'input window, operand 1, single buffered']
    #allocation6 [shape = 's32[1]{0}', space=sflag, size = 0x4, scoped, tag = 'scoped memory for tpu_custom_call.1']
    #allocation7 [shape = 'u8[8192]{0}', space=vmem, size = 0x2000, scoped, tag = 'output window, operand 0, single buffered']
    %8 = vsyncpa [#allocation3], 0
    %9 = vsyncpa [#allocation6], 0
    %10 = vsyncpa [#allocation4], 0
    // Predicated region
    $region2: #{tpu_custom_call.1} parent=1 // pred_check
      _
    $region3: #{tpu_custom_call.1} parent=1 // pred_check_branch
      %12 = sbr.rel (0) target = $region5
    $region4: #{tpu_custom_call.1} parent=1 // pred_region
      %14 = vsyncadd [#allocation3], 0
      %s15 = sshll.u32 %s0, 4
      %s16 = int_to_ptr.hbm [resolvable:$true] %s15
      %s17 = sshll.u32 [#allocation2], 4
      %s18 = int_to_ptr.vmem [resolvable:$true] %s17
      %23 = dma.hbm_to_vmem [thread:$0]  %s16, 256, %s18, [#allocation3], 128, 128, 8
    $region5: #{tpu_custom_call.1} parent=1 // pred_fallthru
      _
    // Predicated region
    $region6: #{tpu_custom_call.1} parent=1 // pred_check
      _
    $region7: #{tpu_custom_call.1} parent=1 // pred_check_branch
      %25 = sbr.rel (0) target = $region9
    $region8: #{tpu_custom_call.1} parent=1 // pred_region
      %27 = vsyncadd [#allocation6], 0
      %s29 = sshll.u32 %s1, 4
      %s30 = int_to_ptr.hbm [resolvable:$true] %s29
      %s31 = sshll.u32 [#allocation5], 4
      %s32 = int_to_ptr.vmem [resolvable:$true] %s31
      %34 = dma.hbm_to_vmem [thread:$0]  %s30, 16, %s32, [#allocation6]
    $region9: #{tpu_custom_call.1} parent=1 // pred_fallthru
      _
    // Predicated region
    $region10: #{tpu_custom_call.1} parent=1 // pred_check
      _
    $region11: #{tpu_custom_call.1} parent=1 // pred_check_branch
      %36 = sbr.rel (0) target = $region13
    $region12: #{tpu_custom_call.1} parent=1 // pred_region
      _
    $region13: #{tpu_custom_call.1} parent=1 // pred_fallthru
      _
    // Predicated region
    $region14: #{tpu_custom_call.1} parent=1 // pred_check
      _
    $region15: #{tpu_custom_call.1} parent=1 // pred_check_branch
      %38 = sbr.rel (0) target = $region17
    $region16: #{tpu_custom_call.1} parent=1 // pred_region
      %40 = dma.done [#allocation3], 256
    $region17: #{tpu_custom_call.1} parent=1 // pred_fallthru
      _
    // Predicated region
    $region18: #{tpu_custom_call.1} parent=1 // pred_check
      _
    $region19: #{tpu_custom_call.1} parent=1 // pred_check_branch
      %42 = sbr.rel (0) target = $region21
    $region20: #{tpu_custom_call.1} parent=1 // pred_region
      %44 = dma.done [#allocation6], 16
    $region21: #{tpu_custom_call.1} parent=1 // pred_fallthru
      _
    %v45 = vld [vmem:[#allocation2] sm:$0xff]
    %v46 = vld [vmem:[#allocation2 + $0x8] sm:$0xff]
    %vm47 = vcmask 261120
    %v48 = vsel %vm47, %v45, 0.0
    %49 = vadd.xlane.f32.xlu0 %v48
    %v50 = vpop.xlane.xlu0 %49
    %v51 = vsel %vm47, %v46, 0.0
    %52 = vadd.xlane.f32.xlu0 %v51
    %v53 = vpop.xlane.xlu0 %52
    %v54 = vrcp.pop 32.0
    %v55 = vmul.f32 32.0, %v54
    %v56 = vsub.f32 1.0, %v55
    %v57 = vmul.f32 %v54, %v56
    %v58 = vadd.f32 %v54, %v57
    %vm59 = vweird.f32 %v54
    %v60 = vsel %vm59, %v54, %v58
    %v61 = vmul.f32 %v50, %v60
    %v62 = vmul.f32 %v53, %v60
    %v63 = vsub.f32 %v45, %v61
    %v64 = vsub.f32 %v46, %v62
    %v65 = vmul.f32 %v63, %v63
    %v66 = vmul.f32 %v64, %v64
    %v67 = vsel %vm47, %v65, 0.0
    %68 = vadd.xlane.f32.xlu0 %v67
    %v69 = vpop.xlane.xlu0 %68
    %v70 = vsel %vm47, %v66, 0.0
    %71 = vadd.xlane.f32.xlu0 %v70
    %v72 = vpop.xlane.xlu0 %71
    %v73 = vrcp.pop 31.0
    %v74 = vmul.f32 31.0, %v73
    %v75 = vsub.f32 1.0, %v74
    %v76 = vmul.f32 %v73, %v75
    %v77 = vadd.f32 %v73, %v76
    %vm78 = vweird.f32 %v73
    %v79 = vsel %vm78, %v73, %v77
    %v80 = vmul.f32 %v69, %v79
    %v81 = vmul.f32 %v72, %v79
    %v82 = vrsqrt.pop %v80
    %v83 = vmul.f32 %v82, %v80
    %v84 = vmul.f32 %v83, %v82
    %v85 = vmul.f32 0.5, %v84
    %v86 = vsub.f32 1.5, %v85
    %v87 = vmul.f32 %v82, %v86
    %v88 = vmul.f32 %v80, %v87
    %vm89 = vcmp.eq.f32.partialorder %v80, inf
    %v90 = vsel %vm89, %v80, %v88
    %vm91 = vcmp.eq.f32.partialorder %v80, 0.0
    %v92 = vand.u32 %v80, 2147483648
    %v93 = vsel %vm91, %v92, %v90
    %v94 = vrsqrt.pop %v81
    %v95 = vmul.f32 %v94, %v81
    %v96 = vmul.f32 %v95, %v94
    %v97 = vmul.f32 0.5, %v96
    %v98 = vsub.f32 1.5, %v97
    %v99 = vmul.f32 %v94, %v98
    %v100 = vmul.f32 %v81, %v99
    %vm101 = vcmp.eq.f32.partialorder %v81, inf
    %v102 = vsel %vm101, %v81, %v100
    %vm103 = vcmp.eq.f32.partialorder %v81, 0.0
    %v104 = vand.u32 %v81, 2147483648
    %v105 = vsel %vm103, %v104, %v102
    %v106 = vld [vmem:[#allocation5] sm:$0x1]
    %v108 = vperm.slane %v106, 0
    %v110 = vmul.f32 %v108, %v63
    %v111 = vmul.f32 %v108, %v64
    %v112 = vadd.f32 %v93, 1e-06
    %v113 = vadd.f32 %v105, 1e-06
    %v114 = vrcp.pop %v112
    %v115 = vmul.f32 %v112, %v114
    %v116 = vsub.f32 1.0, %v115
    %v117 = vmul.f32 %v114, %v116
    %v118 = vadd.f32 %v114, %v117
    %vm119 = vweird.f32 %v112
    %vm120 = vweird.f32 %v114
    %vm121 = vmor %vm119, %vm120
    %v122 = vsel %vm121, %v114, %v118
    %v123 = vand.u32 2147483647, %v112
    %vm124 = vcmp.eq.f32.partialorder %v123, 8.507059e+37
    %v125 = vand.u32 %v112, 2147483648
    %v126 = vor.u32 1.1754944e-38, %v125
    %v127 = vsel %vm124, %v126, %v122
    %v128 = vmul.f32 %v110, %v127
    %v129 = vrcp.pop %v113
    %v130 = vmul.f32 %v113, %v129
    %v131 = vsub.f32 1.0, %v130
    %v132 = vmul.f32 %v129, %v131
    %v133 = vadd.f32 %v129, %v132
    %vm134 = vweird.f32 %v113
    %vm135 = vweird.f32 %v129
    %vm136 = vmor %vm134, %vm135
    %v137 = vsel %vm136, %v129, %v133
    %v138 = vand.u32 2147483647, %v113
    %vm139 = vcmp.eq.f32.partialorder %v138, 8.507059e+37
    %v140 = vand.u32 %v113, 2147483648
    %v141 = vor.u32 1.1754944e-38, %v140
    %v142 = vsel %vm139, %v141, %v137
    %v143 = vmul.f32 %v111, %v142
    %v144 = vld [vmem:[%s2] sm:$0x1]
    %v146 = vperm.slane %v144, 0
    %v148 = vadd.f32 %v128, %v146
    %v149 = vadd.f32 %v143, %v146
    %150 = vst.msk [vmem:[#allocation7] sm:$0xff] %vm47, %v148
    %151 = vst.msk [vmem:[#allocation7 + $0x8] sm:$0xff] %vm47, %v149
    // Predicated region
    $region22: #{tpu_custom_call.1} parent=1 // pred_check
      _
    $region23: #{tpu_custom_call.1} parent=1 // pred_check_branch
      %153 = sbr.rel (0) target = $region25
    $region24: #{tpu_custom_call.1} parent=1 // pred_region
      %155 = vsyncadd [#allocation4], 0
      %s156 = sshll.u32 [#allocation7], 4
      %s157 = int_to_ptr.vmem [resolvable:$true] %s156
      %s158 = sshll.u32 %s3, 4
      %s159 = int_to_ptr.hbm [resolvable:$true] %s158
      %164 = dma.vmem_to_hbm [thread:$0]  %s157, 256, %s159, [#allocation4], 128, 128, 8
    $region25: #{tpu_custom_call.1} parent=1 // pred_fallthru
      _
    // Predicated region
    $region26: #{tpu_custom_call.1} parent=1 // pred_check
      _
    $region27: #{tpu_custom_call.1} parent=1 // pred_check_branch
      %166 = sbr.rel (0) target = $region29
    $region28: #{tpu_custom_call.1} parent=1 // pred_region
      %168 = dma.done [#allocation4], 256
    $region29: #{tpu_custom_call.1} parent=1 // pred_fallthru
      _
    %169 = vsyncpa [#allocation3], 1
    %170 = vsyncpa [#allocation6], 1
    %171 = vsyncpa [#allocation4], 1

</llo_original>
